<compile_context>
chip_gen: v7x
topology: tpu7x:2x2x1
jax: 0.10.0
libtpu: 0.0.40
codegen_flags: <defaults>
</compile_context>

<pallas_src>
import math
import functools

import jax
import jax.numpy as jnp
from jax import lax
from jax.experimental import pallas as pl
from jax.experimental.pallas import tpu as pltpu


def _round_up(x, m):
    return ((x + m - 1) // m) * m


def _rbm_sample_h_kernel(seed_ref, v_ref, w_ref, b_ref, prob_ref, sample_ref,
                         acc_ref, *, total_cols):
    j = pl.program_id(0)   # h tile
    i = pl.program_id(1)   # batch tile
    k = pl.program_id(2)   # reduction over v_dim

    @pl.when(k == 0)
    def _():
        acc_ref[...] = jnp.zeros_like(acc_ref)

    # MXU matmul (bf16 inputs, f32 accumulation).
    acc_ref[...] += jnp.dot(v_ref[...], w_ref[...],
                            preferred_element_type=jnp.float32)

    @pl.when(k == pl.num_programs(2) - 1)
    def _():
        logits = acc_ref[...] + b_ref[...]          # b_ref is (1, tn), broadcasts
        prob = jax.nn.sigmoid(logits)               # f32 elementwise path
        prob_ref[...] = prob.astype(prob_ref.dtype)

        # ---- Bernoulli sampling via counter-based hash PRNG (splitmix32) ----
        tm, tn = prob.shape
        rows = lax.broadcasted_iota(jnp.int32, (tm, tn), 0) + i * tm
        cols = lax.broadcasted_iota(jnp.int32, (tm, tn), 1) + j * tn
        # Unique per-element counter + seed mixing (int32 wraparound is fine).
        golden = jnp.int32(-1640531527)             # 0x9E3779B9 as int32
        counter = rows * total_cols + cols + seed_ref[0] * golden
        x = lax.bitcast_convert_type(counter, jnp.uint32)
        x = x ^ (x >> 16)
        x = x * jnp.uint32(0x7FEB352D)
        x = x ^ (x >> 15)
        x = x * jnp.uint32(0x846CA68B)
        x = x ^ (x >> 16)
        # Exponent-OR trick: 23 random mantissa bits -> uniform f32 in [0, 1).
        u = lax.bitcast_convert_type((x >> 9) | jnp.uint32(0x3F800000),
                                     jnp.float32) - jnp.float32(1.0)
        sample_ref[...] = (u < prob).astype(sample_ref.dtype)


@functools.partial(jax.jit, static_argnames=("compute_dtype",))
def rbm_sample_h(v, w, b, seed, *, compute_dtype=jnp.bfloat16):
    """Pallas TPU implementation of RBM.forward (== sample_h).

    v: [B, v_dim] float32, w: [v_dim, h_dim] float32, b: [h_dim] float32.
    Returns (prob, sample), both [B, h_dim] float32.
    """
    v = jnp.asarray(v, jnp.float32)
    w = jnp.asarray(w, jnp.float32)
    b = jnp.asarray(b, jnp.float32)
    B, v_dim = v.shape
    h_dim = w.shape[1]

    # Tile sizes: lane-dense h tiles (multiple of 128), bf16-friendly batch
    # tiles (multiple of 16), 128-aligned reduction tiles. Caps keep the
    # double-buffered working set a few MiB -> fits scoped VMEM on v5e/v6e/v7x.
    tm = min(256, _round_up(B, 16))
    tn = min(512, _round_up(h_dim, 128))
    tk = min(512, _round_up(v_dim, 128))

    Bp = _round_up(B, tm)
    Hp = _round_up(h_dim, tn)
    Vp = _round_up(v_dim, tk)

    # Zero-padded, bf16-cast operands (bf16 MXU inputs halve w's HBM traffic).
    v_p = jnp.zeros((Bp, Vp), compute_dtype).at[:B, :v_dim].set(
        v.astype(compute_dtype))
    w_p = jnp.zeros((Vp, Hp), compute_dtype).at[:v_dim, :h_dim].set(
        w.astype(compute_dtype))
    b_p = jnp.zeros((1, Hp), jnp.float32).at[:, :h_dim].set(b.reshape(1, h_dim))
    seed_arr = jnp.asarray([seed], dtype=jnp.int32)

    # Grid ordering: h tiles outermost, batch tiles next, reduction innermost.
    # w's block index (k, j) is independent of i, so at single-k shapes the w
    # tile stays resident across consecutive batch tiles.
    grid = (Hp // tn, Bp // tm, Vp // tk)

    out_shapes = (
        jax.ShapeDtypeStruct((Bp, Hp), jnp.float32),   # prob
        jax.ShapeDtypeStruct((Bp, Hp), jnp.float32),   # sample
    )

    itemsize = jnp.dtype(compute_dtype).itemsize
    cost = pl.CostEstimate(
        flops=2 * Bp * Vp * Hp,
        transcendentals=Bp * Hp,
        bytes_accessed=(Bp * Vp * itemsize + Vp * Hp * itemsize
                        + Hp * 4 + 2 * Bp * Hp * 4),
    )

    kernel = functools.partial(_rbm_sample_h_kernel, total_cols=Hp)

    prob, sample = pl.pallas_call(
        kernel,
        out_shape=out_shapes,
        grid_spec=pltpu.PrefetchScalarGridSpec(
            num_scalar_prefetch=0,
            grid=grid,
            in_specs=[
                pl.BlockSpec(memory_space=pltpu.MemorySpace.SMEM),    # seed
                pl.BlockSpec((tm, tk), lambda j, i, k: (i, k)),       # v
                pl.BlockSpec((tk, tn), lambda j, i, k: (k, j)),       # w
                pl.BlockSpec((1, tn), lambda j, i, k: (0, j)),        # b
            ],
            out_specs=(
                pl.BlockSpec((tm, tn), lambda j, i, k: (i, j)),       # prob
                pl.BlockSpec((tm, tn), lambda j, i, k: (i, j)),       # sample
            ),
            scratch_shapes=[pltpu.VMEM((tm, tn), jnp.float32)],       # f32 acc
        ),
        compiler_params=pltpu.CompilerParams(
            dimension_semantics=("parallel", "parallel", "arbitrary")),
        cost_estimate=cost,
    )(seed_arr, v_p, w_p, b_p)

    return prob[:B, :h_dim], sample[:B, :h_dim]


def xavier_normal(key, v_dim, h_dim, gain=1.0):
    std = gain * math.sqrt(2.0 / (v_dim + h_dim))
    return std * jax.random.normal(key, (v_dim, h_dim), dtype=jnp.float32)


if __name__ == "__main__":
    # Small shapes consistent with the module: v: [B, v_dim].
    B, V_DIM, H_DIM = 8, 16, 32

    key = jax.random.PRNGKey(0)
    k_w, k_v = jax.random.split(key)

    # Mirrors __init__: xavier_normal w, zero a/b (a unused by forward).
    w = xavier_normal(k_w, V_DIM, H_DIM)
    a = jnp.zeros((V_DIM,), dtype=jnp.float32)
    b = jnp.zeros((H_DIM,), dtype=jnp.float32)

    v = jax.random.uniform(k_v, (B, V_DIM), dtype=jnp.float32)

    prob, sample = rbm_sample_h(v, w, b, seed=0)
    jax.block_until_ready((prob, sample))

    # Sanity: prob matches reference (bf16 MXU inputs -> loose tolerance);
    # sample is {0,1}-valued with the right shape.
    ref_prob = jax.nn.sigmoid(v @ w + b)
    assert prob.shape == (B, H_DIM) and sample.shape == (B, H_DIM)
    assert jnp.allclose(prob, ref_prob, atol=2e-2), "prob mismatch vs reference"
    assert bool(jnp.all((sample == 0.0) | (sample == 1.0))), "sample not binary"

    print("KERNEL_OK")
</pallas_src>

<mosaic_0001>
module attributes {stable_mosaic.version = 11 : i64} {
  func.func @_rbm_sample_h_kernel(%arg0: i32, %arg1: i32, %arg2: i32, %arg3: memref<1xi32, #tpu.memory_space<smem>>, %arg4: memref<16x128xbf16, #tpu.memory_space<vmem>>, %arg5: memref<128x128xbf16, #tpu.memory_space<vmem>>, %arg6: memref<1x128xf32, #tpu.memory_space<vmem>>, %arg7: memref<16x128xf32, #tpu.memory_space<vmem>>, %arg8: memref<16x128xf32, #tpu.memory_space<vmem>>, %arg9: memref<16x128xf32, #tpu.memory_space<vmem>>) attributes {dimension_semantics = [#tpu.dimension_semantics<parallel>, #tpu.dimension_semantics<parallel>, #tpu.dimension_semantics<arbitrary>], iteration_bounds = array<i64: 1, 1, 1>, scalar_prefetch = 0 : i64, scratch_operands = 1 : i64, tpu.core_type = #tpu.core_type<tc>, window_params = [{transform_indices = @transform_0, window_bounds = array<i64: 1>}, {transform_indices = @transform_1, window_bounds = array<i64: 16, 128>}, {transform_indices = @transform_2, window_bounds = array<i64: 128, 128>}, {transform_indices = @transform_3, window_bounds = array<i64: 1, 128>}, {transform_indices = @transform_4, window_bounds = array<i64: 16, 128>}, {transform_indices = @transform_5, window_bounds = array<i64: 16, 128>}]} {
    %c0_i32 = arith.constant 0 : i32
    %0 = arith.cmpi eq, %arg2, %c0_i32 : i32
    %1 = arith.extui %0 : i1 to i32
    %c0_i32_0 = arith.constant 0 : i32
    %2 = arith.cmpi ne, %1, %c0_i32_0 : i32
    scf.if %2 {
      %cst_10 = arith.constant 0.000000e+00 : f32
      %12 = vector.broadcast %cst_10 : f32 to vector<16x128xf32>
      %c0_11 = arith.constant 0 : index
      %c0_12 = arith.constant 0 : index
      %13 = vector.load %arg9[%c0_11, %c0_12] : memref<16x128xf32, #tpu.memory_space<vmem>>, vector<16x128xf32>
      tpu.vector_store %arg9[%c0_11, %c0_12], %12 {strides = array<i32>} : memref<16x128xf32, #tpu.memory_space<vmem>>, vector<16x128xf32>,
    } else {
    }
    %c0 = arith.constant 0 : index
    %c0_1 = arith.constant 0 : index
    %3 = vector.load %arg9[%c0, %c0_1] : memref<16x128xf32, #tpu.memory_space<vmem>>, vector<16x128xf32>
    %c0_2 = arith.constant 0 : index
    %c0_3 = arith.constant 0 : index
    %4 = vector.load %arg4[%c0_2, %c0_3] : memref<16x128xbf16, #tpu.memory_space<vmem>>, vector<16x128xbf16>
    %c0_4 = arith.constant 0 : index
    %c0_5 = arith.constant 0 : index
    %5 = vector.load %arg5[%c0_4, %c0_5] : memref<128x128xbf16, #tpu.memory_space<vmem>>, vector<128x128xbf16>
    %cst = arith.constant dense<0.000000e+00> : vector<16x128xf32>
    %6 = tpu.matmul %4, %5, %cst {dimension_numbers = #tpu.dot_dimension_numbers<[1], [0], [0], [1], [0, 0, 1, 1], [], []>} : vector<16x128xbf16>, vector<128x128xbf16>, vector<16x128xf32> -> vector<16x128xf32>
    %7 = arith.addf %3, %6 : vector<16x128xf32>
    %c0_6 = arith.constant 0 : index
    %c0_7 = arith.constant 0 : index
    %8 = vector.load %arg9[%c0_6, %c0_7] : memref<16x128xf32, #tpu.memory_space<vmem>>, vector<16x128xf32>
    tpu.vector_store %arg9[%c0_6, %c0_7], %7 {strides = array<i32>} : memref<16x128xf32, #tpu.memory_space<vmem>>, vector<16x128xf32>,
    %c0_i32_8 = arith.constant 0 : i32
    %9 = arith.cmpi eq, %arg2, %c0_i32_8 : i32
    %10 = arith.extui %9 : i1 to i32
    %c0_i32_9 = arith.constant 0 : i32
    %11 = arith.cmpi ne, %10, %c0_i32_9 : i32
    scf.if %11 {
      %c0_10 = arith.constant 0 : index
      %c0_11 = arith.constant 0 : index
      %12 = vector.load %arg9[%c0_10, %c0_11] : memref<16x128xf32, #tpu.memory_space<vmem>>, vector<16x128xf32>
      %c0_12 = arith.constant 0 : index
      %c0_13 = arith.constant 0 : index
      %13 = vector.load %arg6[%c0_12, %c0_13] : memref<1x128xf32, #tpu.memory_space<vmem>>, vector<1x128xf32>
      %14 = vector.broadcast %13 : vector<1x128xf32> to vector<16x128xf32>
      %15 = arith.addf %12, %14 : vector<16x128xf32>
      %16 = arith.negf %15 : vector<16x128xf32>
      %17 = math.exp %16 : vector<16x128xf32>
      %cst_14 = arith.constant 1.000000e+00 : f32
      %18 = vector.broadcast %cst_14 : f32 to vector<16x128xf32>
      %19 = arith.addf %18, %17 : vector<16x128xf32>
      %20 = arith.divf %18, %19 : vector<16x128xf32>
      %c0_15 = arith.constant 0 : index
      %c0_16 = arith.constant 0 : index
      %21 = vector.load %arg7[%c0_15, %c0_16] : memref<16x128xf32, #tpu.memory_space<vmem>>, vector<16x128xf32>
      tpu.vector_store %arg7[%c0_15, %c0_16], %20 {strides = array<i32>} : memref<16x128xf32, #tpu.memory_space<vmem>>, vector<16x128xf32>,
      %22 = tpu.iota {dimensions = array<i32: 0>} : vector<16x128xi32>
      %c16_i32 = arith.constant 16 : i32
      %23 = arith.muli %arg1, %c16_i32 : i32
      %24 = vector.broadcast %23 : i32 to vector<16x128xi32>
      %25 = arith.addi %22, %24 : vector<16x128xi32>
      %26 = tpu.iota {dimensions = array<i32: 1>} : vector<16x128xi32>
      %c128_i32 = arith.constant 128 : i32
      %27 = arith.muli %arg0, %c128_i32 : i32
      %28 = vector.broadcast %27 : i32 to vector<16x128xi32>
      %29 = arith.addi %26, %28 : vector<16x128xi32>
      %c128_i32_17 = arith.constant 128 : i32
      %30 = vector.broadcast %c128_i32_17 : i32 to vector<16x128xi32>
      %31 = arith.muli %25, %30 : vector<16x128xi32>
      %32 = arith.addi %31, %29 : vector<16x128xi32>
      %c0_18 = arith.constant 0 : index
      %33 = memref.load %arg3[%c0_18] : memref<1xi32, #tpu.memory_space<smem>>
      %c-1640531527_i32 = arith.constant -1640531527 : i32
      %34 = arith.muli %33, %c-1640531527_i32 : i32
      %35 = vector.broadcast %34 : i32 to vector<16x128xi32>
      %36 = arith.addi %32, %35 : vector<16x128xi32>
      %37 = tpu.bitcast %36 : vector<16x128xi32> -> vector<16x128xi32>
      %c16_i32_19 = arith.constant 16 : i32
      %38 = vector.broadcast %c16_i32_19 : i32 to vector<16x128xi32>
      %39 = arith.shrui %37, %38 : vector<16x128xi32>
      %40 = arith.xori %37, %39 : vector<16x128xi32>
      %c2146121005_i32 = arith.constant 2146121005 : i32
      %41 = vector.broadcast %c2146121005_i32 : i32 to vector<16x128xi32>
      %42 = arith.muli %40, %41 : vector<16x128xi32>
      %c15_i32 = arith.constant 15 : i32
      %43 = vector.broadcast %c15_i32 : i32 to vector<16x128xi32>
      %44 = arith.shrui %42, %43 : vector<16x128xi32>
      %45 = arith.xori %42, %44 : vector<16x128xi32>
      %c-2073254261_i32 = arith.constant -2073254261 : i32
      %46 = vector.broadcast %c-2073254261_i32 : i32 to vector<16x128xi32>
      %47 = arith.muli %45, %46 : vector<16x128xi32>
      %c16_i32_20 = arith.constant 16 : i32
      %48 = vector.broadcast %c16_i32_20 : i32 to vector<16x128xi32>
      %49 = arith.shrui %47, %48 : vector<16x128xi32>
      %50 = arith.xori %47, %49 : vector<16x128xi32>
      %c9_i32 = arith.constant 9 : i32
      %51 = vector.broadcast %c9_i32 : i32 to vector<16x128xi32>
      %52 = arith.shrui %50, %51 : vector<16x128xi32>
      %c1065353216_i32 = arith.constant 1065353216 : i32
      %53 = vector.broadcast %c1065353216_i32 : i32 to vector<16x128xi32>
      %54 = arith.ori %52, %53 : vector<16x128xi32>
      %55 = tpu.bitcast %54 : vector<16x128xi32> -> vector<16x128xf32>
      %cst_21 = arith.constant 1.000000e+00 : f32
      %56 = vector.broadcast %cst_21 : f32 to vector<16x128xf32>
      %57 = arith.subf %55, %56 : vector<16x128xf32>
      %58 = arith.cmpf olt, %57, %20 : vector<16x128xf32>
      %59 = arith.extui %58 : vector<16x128xi1> to vector<16x128xi32>
      %60 = arith.sitofp %59 : vector<16x128xi32> to vector<16x128xf32>
      %c0_22 = arith.constant 0 : index
      %c0_23 = arith.constant 0 : index
      %61 = vector.load %arg8[%c0_22, %c0_23] : memref<16x128xf32, #tpu.memory_space<vmem>>, vector<16x128xf32>
      tpu.vector_store %arg8[%c0_22, %c0_23], %60 {strides = array<i32>} : memref<16x128xf32, #tpu.memory_space<vmem>>, vector<16x128xf32>,
    } else {
    }
    return
  }
  func.func @transform_0(%arg0: i32, %arg1: i32, %arg2: i32) -> i32 {
    %c0_i32 = arith.constant 0 : i32
    %c0_i32_0 = arith.constant 0 : i32
    return %c0_i32 : i32
  }
  func.func @transform_1(%arg0: i32, %arg1: i32, %arg2: i32) -> (i32, i32) {
    %c0_i32 = arith.constant 0 : i32
    return %arg1, %arg2 : i32, i32
  }
  func.func @transform_2(%arg0: i32, %arg1: i32, %arg2: i32) -> (i32, i32) {
    %c0_i32 = arith.constant 0 : i32
    return %arg2, %arg0 : i32, i32
  }
  func.func @transform_3(%arg0: i32, %arg1: i32, %arg2: i32) -> (i32, i32) {
    %c0_i32 = arith.constant 0 : i32
    %c0_i32_0 = arith.constant 0 : i32
    return %c0_i32, %arg0 : i32, i32
  }
  func.func @transform_4(%arg0: i32, %arg1: i32, %arg2: i32) -> (i32, i32) {
    %c0_i32 = arith.constant 0 : i32
    return %arg1, %arg0 : i32, i32
  }
  func.func @transform_5(%arg0: i32, %arg1: i32, %arg2: i32) -> (i32, i32) {
    %c0_i32 = arith.constant 0 : i32
    return %arg1, %arg0 : i32, i32
  }
}

</mosaic_0001>

<llo_original>
// kernel: rbm_sample_h.1
$region0: #{rbm_sample_h.1}
  #allocation0 [shape = 'u32[]', space=smem, size = 0x4, offset = 0x4, fixed_abs, tag = 'smem constant byte address 0x4 - core index']
  #allocation1 [shape = 'u32[144,128]{1,0:T(1,128)}', space=vmem, size = 0x12000, scoped, tag = 'internal scratch']
  #allocation2 [shape = 'f32[16,128]{1,0:T(8,128)}', space=vmem, size = 0x2000, scoped, tag = 'scratch operand']
  #allocation3 [shape = 's32[1]{0:T(128)S(6)}', space=smem, size = 0x200, scoped, tag = 'scoped memory for rbm_sample_h.1']
  %s0 = inlined_call_operand.<no memory space> [shape: s32[1], index: 0, kind: input, shape index: {}]
  %s1 = inlined_call_operand.vmem [shape: bf16[16,128], index: 1, kind: input, shape index: {}]
  %s2 = inlined_call_operand.vmem [shape: bf16[128,128], index: 2, kind: input, shape index: {}]
  %s3 = inlined_call_operand.vmem [shape: f32[1,128], index: 3, kind: input, shape index: {}]
  %s4 = inlined_call_operand.vmem [shape: f32[16,128], index: 4, kind: output, shape index: {0}]
  %s5 = inlined_call_operand.vmem [shape: f32[16,128], index: 5, kind: output, shape index: {1}]
  %6 = xla_tuple %s4, %s5
  %s7 = sld [smem:[#allocation0]]
  $region42: #{rbm_sample_h.1} parent=0
    _
  %s9 = ssub.s32 1, %s7
  %s10 = scalar_select 0, %s9, %s7
  %11 = sst [smem:[#allocation3]] %s0
  // Predicated region
  $region2: #{rbm_sample_h.1} parent=0 // pred_check
    _
  $region3: #{rbm_sample_h.1} parent=0 // pred_check_branch
    %13 = sbr.rel (0) target = $region5
  $region4: #{rbm_sample_h.1} parent=0 // pred_region
    _
  $region5: #{rbm_sample_h.1} parent=0 // pred_fallthru
    _
  // Predicated region
  $region6: #{rbm_sample_h.1} parent=0 // pred_check
    _
  $region7: #{rbm_sample_h.1} parent=0 // pred_check_branch
    %15 = sbr.rel (0) target = $region9
  $region8: #{rbm_sample_h.1} parent=0 // pred_region
    _
  $region9: #{rbm_sample_h.1} parent=0 // pred_fallthru
    _
  // Predicated region
  $region10: #{rbm_sample_h.1} parent=0 // pred_check
    _
  $region11: #{rbm_sample_h.1} parent=0 // pred_check_branch
    %17 = sbr.rel (0) target = $region13
  $region12: #{rbm_sample_h.1} parent=0 // pred_region
    _
  $region13: #{rbm_sample_h.1} parent=0 // pred_fallthru
    _
  // Predicated region
  $region14: #{rbm_sample_h.1} parent=0 // pred_check
    _
  $region15: #{rbm_sample_h.1} parent=0 // pred_check_branch
    %19 = sbr.rel (0) target = $region17
  $region16: #{rbm_sample_h.1} parent=0 // pred_region
    _
  $region17: #{rbm_sample_h.1} parent=0 // pred_fallthru
    _
  %p21 = scmp.eq.s32.totalorder 0, 0
  // Predicated region
  $region18: #{rbm_sample_h.1} parent=0 // pred_check
    %p22 = pneg %p21
  $region19: #{rbm_sample_h.1} parent=0 // pred_check_branch
    %24 = sbr.rel (%p22) target = $region21
  $region20: #{rbm_sample_h.1} parent=0 // pred_region
    %25 = vst [vmem:[#allocation2] sm:$0xff] 0.0
    %26 = vst [vmem:[#allocation2 + $0x8] sm:$0xff] 0.0
  $region21: #{rbm_sample_h.1} parent=0 // pred_fallthru
    _
  %v27 = vld [vmem:[#allocation2] sm:$0xff]
  %v28 = vld [vmem:[#allocation2 + $0x8] sm:$0xff]
  %v29 = vld [vmem:[%s1] sm:$0xf]
  %v30 = vld [vmem:[%s1 + $0x4] sm:$0xf]
  %v31 = vld [vmem:[%s2] sm:$0xf]
  %v32 = vld [vmem:[%s2 + $0x4] sm:$0xf]
  %v33 = vld [vmem:[%s2 + $0x8] sm:$0xf]
  %v34 = vld [vmem:[%s2 + $0xc] sm:$0xf]
  %v35 = vld [vmem:[%s2 + $0x10] sm:$0xf]
  %v36 = vld [vmem:[%s2 + $0x14] sm:$0xf]
  %v37 = vld [vmem:[%s2 + $0x18] sm:$0xf]
  %v38 = vld [vmem:[%s2 + $0x1c] sm:$0xf]
  %v39 = vld [vmem:[%s2 + $0x20] sm:$0xf]
  %v40 = vld [vmem:[%s2 + $0x24] sm:$0xf]
  %v41 = vld [vmem:[%s2 + $0x28] sm:$0xf]
  %v42 = vld [vmem:[%s2 + $0x2c] sm:$0xf]
  %v43 = vld [vmem:[%s2 + $0x30] sm:$0xf]
  %v44 = vld [vmem:[%s2 + $0x34] sm:$0xf]
  %v45 = vld [vmem:[%s2 + $0x38] sm:$0xf]
  %v46 = vld [vmem:[%s2 + $0x3c] sm:$0xf]
  %v49 = vunpack.c.l.b16 %v29
  %v50 = vunpack.c.l.b16 %v30
  %v51 = vpack.c.b16 %v50, %v49
  %v69 = vunpack.c.l.b16 %v31
  %v70 = vunpack.c.l.b16 %v32
  %v71 = vunpack.c.l.b16 %v33
  %v72 = vunpack.c.l.b16 %v34
  %v73 = vunpack.c.l.b16 %v35
  %v74 = vunpack.c.l.b16 %v36
  %v75 = vunpack.c.l.b16 %v37
  %v76 = vunpack.c.l.b16 %v38
  %v77 = vunpack.c.l.b16 %v39
  %v78 = vunpack.c.l.b16 %v40
  %v79 = vunpack.c.l.b16 %v41
  %v80 = vunpack.c.l.b16 %v42
  %v81 = vunpack.c.l.b16 %v43
  %v82 = vunpack.c.l.b16 %v44
  %v83 = vunpack.c.l.b16 %v45
  %v84 = vunpack.c.l.b16 %v46
  %v85 = vpack.c.b16 %v70, %v69
  %v86 = vpack.c.b16 %v72, %v71
  %v87 = vpack.c.b16 %v74, %v73
  %v88 = vpack.c.b16 %v76, %v75
  %v89 = vpack.c.b16 %v78, %v77
  %v90 = vpack.c.b16 %v80, %v79
  %v91 = vpack.c.b16 %v82, %v81
  %v92 = vpack.c.b16 %v84, %v83
  %101 = vmatprep.subr.bf16.mxu0 0
  %102 = vmatpush1.bf16.msra.mxu0 %v85
  %103 = vmatprep.subr.bf16.mxu0 0
  %104 = vmatpush1.bf16.msra.mxu0 %v86
  %105 = vmatprep.subr.bf16.mxu0 0
  %106 = vmatpush1.bf16.msra.mxu0 %v87
  %107 = vmatprep.subr.bf16.mxu0 0
  %108 = vmatpush1.bf16.msra.mxu0 %v88
  %109 = vmatprep.subr.bf16.mxu0 0
  %110 = vmatpush1.bf16.msra.mxu0 %v89
  %111 = vmatprep.subr.bf16.mxu0 0
  %112 = vmatpush1.bf16.msra.mxu0 %v90
  %113 = vmatprep.subr.bf16.mxu0 0
  %114 = vmatpush1.bf16.msra.mxu0 %v91
  %115 = vmatprep.subr.bf16.mxu0 0
  %116 = vmatpush1.bf16.msra.mxu0 %v92
  %117 = vmatprep.subr.bf16.mxu0 0
  %118 = vmatpush1.bf16.msra.mxu0 0
  %119 = vmatprep.subr.bf16.mxu0 0
  %120 = vmatpush1.bf16.msra.mxu0 0
  %121 = vmatprep.subr.bf16.mxu0 0
  %122 = vmatpush1.bf16.msra.mxu0 0
  %123 = vmatprep.subr.bf16.mxu0 0
  %124 = vmatpush1.bf16.msra.mxu0 0
  %125 = vmatprep.subr.bf16.mxu0 0
  %126 = vmatpush1.bf16.msra.mxu0 0
  %127 = vmatprep.subr.bf16.mxu0 0
  %128 = vmatpush1.bf16.msra.mxu0 0
  %129 = vmatprep.subr.bf16.mxu0 0
  %130 = vmatpush1.bf16.msra.mxu0 0
  %131 = vmatprep.subr.bf16.mxu0 0
  %132 = vmatpush1.bf16.msra.mxu0 0
  %133 = vmatprep.mubr.bf16.mxu0 0
  %134 = vmatmul.mubr.bf16.gmra.mrb[0].mxu0 %v51
  %v135 = vpop.f32.mrb[0].mxu0
  %v136 = vadd.f32 0.0, %v135
  %v137 = vpop.f32.mrb[0].mxu0
  %v138 = vpop.f32.mrb[0].mxu0
  %v139 = vadd.f32 0.0, %v138
  %v140 = vpop.f32.mrb[0].mxu0
  %141 = vdwg.mxu0
  %v142 = vadd.f32 %v27, %v136
  %v143 = vadd.f32 %v28, %v139
  %144 = vst [vmem:[#allocation2] sm:$0xff] %v142
  %145 = vst [vmem:[#allocation2 + $0x8] sm:$0xff] %v143
  // Predicated region
  $region22: #{rbm_sample_h.1} parent=0 // pred_check
    %p146 = pneg %p21
  $region23: #{rbm_sample_h.1} parent=0 // pred_check_branch
    %148 = sbr.rel (%p146) target = $region25
  $region24: #{rbm_sample_h.1} parent=0 // pred_region
    %v149 = vld [vmem:[#allocation2] sm:$0xff]
    %v150 = vld [vmem:[#allocation2 + $0x8] sm:$0xff]
    %v151 = vld [vmem:[%s3] sm:$0x1]
    %v153 = vlaneseq
    %v154 = vshrl.u32 %v153, 7
    %v155 = vsub.s32 0, %v154
    %v156 = vrot.slane %v151, %v155
    %v158 = vadd.f32 %v149, %v156
    %v159 = vadd.f32 %v150, %v156
    %v160 = vxor.u32 %v158, 2147483648
    %v161 = vxor.u32 %v159, 2147483648
    %v162 = vmul.f32 %v160, 1.442695
    %v163 = vpow.pop %v162
    %v164 = vmul.f32 %v161, 1.442695
    %v165 = vpow.pop %v164
    %v166 = vadd.f32 %v163, 1.0
    %v167 = vadd.f32 %v165, 1.0
    %v168 = vrcp.pop %v166
    %v169 = vmul.f32 1.0, %v168
    %v170 = vrcp.pop %v167
    %v171 = vmul.f32 1.0, %v170
    %172 = vst [vmem:[%s4] sm:$0xff] %v169
    %173 = vst [vmem:[%s4 + $0x8] sm:$0xff] %v171
    %v174 = vlaneseq
    %v175 = vshrl.u32 %v174, 7
    %v176 = vadd.s32 %v175, 8
    %s177 = smul.u32 0, 16
    %v178 = vstv %s177
    %v179 = vadd.s32 %v175, %v178
    %v180 = vadd.s32 %v176, %v178
    %v181 = vlaneseq
    %v182 = vand.u32 %v181, 127
    %s183 = smul.u32 0, 128
    %v184 = vstv %s183
    %v185 = vadd.s32 %v182, %v184
    %v186 = vmul.u32 %v179, 128
    %v187 = vmul.u32 %v180, 128
    %v188 = vadd.s32 %v186, %v185
    %v189 = vadd.s32 %v187, %v185
    %s190 = sld [smem:[#allocation3]]
    %s191 = smul.u32 %s190, 2654435769
    %v192 = vstv %s191
    %v193 = vadd.s32 %v188, %v192
    %v194 = vadd.s32 %v189, %v192
    %v195 = vshrl.u32 %v193, 16
    %v196 = vshrl.u32 %v194, 16
    %v197 = vxor.u32 %v193, %v195
    %v198 = vxor.u32 %v194, %v196
    %v199 = vmul.u32 %v197, 2146121005
    %v200 = vmul.u32 %v198, 2146121005
    %v201 = vshrl.u32 %v199, 15
    %v202 = vshrl.u32 %v200, 15
    %v203 = vxor.u32 %v199, %v201
    %v204 = vxor.u32 %v200, %v202
    %v205 = vmul.u32 %v203, 2221713035
    %v206 = vmul.u32 %v204, 2221713035
    %v207 = vshrl.u32 %v205, 16
    %v208 = vshrl.u32 %v206, 16
    %v209 = vxor.u32 %v205, %v207
    %v210 = vxor.u32 %v206, %v208
    %v211 = vshrl.u32 %v209, 9
    %v212 = vshrl.u32 %v210, 9
    %v213 = vor.u32 %v211, 1065353216
    %v214 = vor.u32 %v212, 1065353216
    %v217 = vsub.f32 %v213, 1.0
    %v218 = vsub.f32 %v214, 1.0
    %vm219 = vcmp.lt.f32.partialorder %v217, %v169
    %vm220 = vcmp.lt.f32.partialorder %v218, %v171
    %v221 = vsel %vm219, 1, 0
    %v222 = vsel %vm220, 1, 0
    %v223 = vcvt.s32.f32 %v221
    %v224 = vcvt.s32.f32 %v222
    %225 = vst [vmem:[%s5] sm:$0xff] %v223
    %226 = vst [vmem:[%s5 + $0x8] sm:$0xff] %v224
  $region25: #{rbm_sample_h.1} parent=0 // pred_fallthru
    _
  // Predicated region
  $region26: #{rbm_sample_h.1} parent=0 // pred_check
    _
  $region27: #{rbm_sample_h.1} parent=0 // pred_check_branch
    %228 = sbr.rel (0) target = $region29
  $region28: #{rbm_sample_h.1} parent=0 // pred_region
    _
  $region29: #{rbm_sample_h.1} parent=0 // pred_fallthru
    _
  // Predicated region
  $region30: #{rbm_sample_h.1} parent=0 // pred_check
    _
  $region31: #{rbm_sample_h.1} parent=0 // pred_check_branch
    %230 = sbr.rel (0) target = $region33
  $region32: #{rbm_sample_h.1} parent=0 // pred_region
    _
  $region33: #{rbm_sample_h.1} parent=0 // pred_fallthru
    _
  // Predicated region
  $region34: #{rbm_sample_h.1} parent=0 // pred_check
    _
  $region35: #{rbm_sample_h.1} parent=0 // pred_check_branch
    %232 = sbr.rel (0) target = $region37
  $region36: #{rbm_sample_h.1} parent=0 // pred_region
    _
  $region37: #{rbm_sample_h.1} parent=0 // pred_fallthru
    _
  // Predicated region
  $region38: #{rbm_sample_h.1} parent=0 // pred_check
    _
  $region39: #{rbm_sample_h.1} parent=0 // pred_check_branch
    %234 = sbr.rel (0) target = $region41
  $region40: #{rbm_sample_h.1} parent=0 // pred_region
    _
  $region41: #{rbm_sample_h.1} parent=0 // pred_fallthru
    _

</llo_original>
